<compile_context>
chip_gen: v5e
topology: v5e:2x2
jax: 0.10.0
libtpu: 0.0.40
codegen_flags: <defaults>
</compile_context>

<pallas_src>
import jax
import jax.numpy as jnp
from jax.experimental import pallas as pl
from jax.experimental.pallas import tpu as pltpu


def _round_up(x, m):
    return ((x + m - 1) // m) * m


def _pick_tn(d2, tn_max):
    """Largest multiple of 128 that divides d2 and is <= tn_max (or d2 itself)."""
    if d2 <= tn_max:
        return d2
    t = tn_max - (tn_max % 128)
    while t >= 128:
        if d2 % t == 0:
            return t
        t -= 128
    return d2  # fallback: no hidden-dim tiling


def swiglu_kernel(x_ref, wg_ref, bg_ref, w1_ref, b1_ref, w2_ref, b2_ref,
                  o_ref, acc_ref):
    j = pl.program_id(1)

    @pl.when(j == 0)
    def _():
        acc_ref[...] = jnp.zeros_like(acc_ref)

    x = x_ref[...]                                           # (tm, D) bf16

    # gate branch: silu(x @ WG_j + bg_j), f32 MXU accumulate
    g = jnp.dot(x, wg_ref[...], preferred_element_type=jnp.float32) + bg_ref[...]
    g = g * jax.nn.sigmoid(g)

    # value branch: x @ W1_j + b1_j
    z = jnp.dot(x, w1_ref[...], preferred_element_type=jnp.float32) + b1_ref[...]

    # partial projection over this D2-tile, accumulated in f32 VMEM scratch
    h = (g * z).astype(w2_ref.dtype)
    acc_ref[...] += jnp.dot(h, w2_ref[...], preferred_element_type=jnp.float32)

    @pl.when(j == pl.num_programs(1) - 1)
    def _():
        o_ref[...] = (acc_ref[...] + b2_ref[...]).astype(o_ref.dtype)


def swiglu_pallas(x, wg, bg, w1, b1, w2, b2, *, tm=256, tn=512,
                  compute_dtype=jnp.bfloat16):
    """x: (B, S, D). wg, w1: (D, 2D); w2: (2D, D); bg, b1: (1, 2D); b2: (1, D)."""
    B, S, D = x.shape
    D2 = wg.shape[1]
    assert D2 == 2 * D and w2.shape == (D2, D)
    M = B * S

    # Tile selection: clamp the row tile for small M, pad rows to a multiple.
    tm_eff = min(tm, _round_up(M, 8))
    M_pad = _round_up(M, tm_eff)
    tn_eff = _pick_tn(D2, tn)

    x2 = x.reshape(M, D).astype(compute_dtype)
    if M_pad != M:
        x2 = jnp.pad(x2, ((0, M_pad - M), (0, 0)))

    wg_c = wg.astype(compute_dtype)
    w1_c = w1.astype(compute_dtype)
    w2_c = w2.astype(compute_dtype)
    bg_c = bg.astype(jnp.float32)
    b1_c = b1.astype(jnp.float32)
    b2_c = b2.astype(jnp.float32)

    grid = (M_pad // tm_eff, D2 // tn_eff)

    wbytes = jnp.dtype(compute_dtype).itemsize
    cost = pl.CostEstimate(
        flops=6 * M_pad * D * D2,                 # 2 matmuls D->D2 + 1 matmul D2->D
        transcendentals=M_pad * D2,               # sigmoid
        bytes_accessed=int(M_pad * D * wbytes     # x
                           + 3 * D * D2 * wbytes  # WG, W1, W2
                           + (2 * D2 + D) * 4     # biases (f32)
                           + M_pad * D * x.dtype.itemsize),  # output
    )

    out = pl.pallas_call(
        swiglu_kernel,
        out_shape=jax.ShapeDtypeStruct((M_pad, D), x.dtype),
        grid_spec=pltpu.PrefetchScalarGridSpec(
            num_scalar_prefetch=0,
            grid=grid,
            in_specs=[
                pl.BlockSpec((tm_eff, D), lambda i, j: (i, 0)),   # x row tile
                pl.BlockSpec((D, tn_eff), lambda i, j: (0, j)),   # WG tile
                pl.BlockSpec((1, tn_eff), lambda i, j: (0, j)),   # bG tile
                pl.BlockSpec((D, tn_eff), lambda i, j: (0, j)),   # W1 tile
                pl.BlockSpec((1, tn_eff), lambda i, j: (0, j)),   # b1 tile
                pl.BlockSpec((tn_eff, D), lambda i, j: (j, 0)),   # W2 tile
                pl.BlockSpec((1, D), lambda i, j: (0, 0)),        # b2
            ],
            out_specs=pl.BlockSpec((tm_eff, D), lambda i, j: (i, 0)),
            scratch_shapes=[pltpu.VMEM((tm_eff, D), jnp.float32)],  # W2 accumulator
        ),
        compiler_params=pltpu.CompilerParams(
            dimension_semantics=("parallel", "arbitrary"),
            vmem_limit_bytes=56 * 1024 * 1024,
        ),
        cost_estimate=cost,
    )(x2, wg_c, bg_c, w1_c, b1_c, w2_c, b2_c)

    return out[:M].reshape(B, S, D)


def swiglu_ref_matched(x, wg, bg, w1, b1, w2, b2, compute_dtype=jnp.bfloat16):
    """Reference matching the kernel's compute precision (bf16 operands, f32 acc)."""
    xb = x.astype(compute_dtype)
    g = jnp.dot(xb, wg.astype(compute_dtype), preferred_element_type=jnp.float32) + bg[0]
    g = g * jax.nn.sigmoid(g)
    z = jnp.dot(xb, w1.astype(compute_dtype), preferred_element_type=jnp.float32) + b1[0]
    h = (g * z).astype(compute_dtype)
    out = jnp.dot(h, w2.astype(compute_dtype), preferred_element_type=jnp.float32) + b2[0]
    return out.astype(x.dtype)


def swiglu_ref_f32(x, wg, bg, w1, b1, w2, b2):
    g = jax.nn.silu(x @ wg + bg[0])
    z = x @ w1 + b1[0]
    return (g * z) @ w2 + b2[0]


if __name__ == "__main__":
    key = jax.random.PRNGKey(0)
    B, S, D = 2, 8, 32
    D2 = 2 * D

    ks = jax.random.split(key, 7)
    x = jax.random.normal(ks[0], (B, S, D), dtype=jnp.float32)

    # PyTorch nn.Linear-style uniform(-1/sqrt(fan_in), 1/sqrt(fan_in)) init.
    def init_linear(kw, kb, fan_in, fan_out):
        bound = 1.0 / (fan_in ** 0.5)
        w = jax.random.uniform(kw, (fan_in, fan_out), jnp.float32, -bound, bound)
        b = jax.random.uniform(kb, (1, fan_out), jnp.float32, -bound, bound)
        return w, b

    wg, bg = init_linear(ks[1], ks[2], D, D2)
    w1, b1 = init_linear(ks[3], ks[4], D, D2)
    w2, b2 = init_linear(ks[5], ks[6], D2, D)

    out = swiglu_pallas(x, wg, bg, w1, b1, w2, b2)
    out = jax.block_until_ready(out)
    assert out.shape == (B, S, D)

    # Tight check vs precision-matched reference, loose sanity vs pure f32.
    ref_m = swiglu_ref_matched(x, wg, bg, w1, b1, w2, b2)
    ref_f = swiglu_ref_f32(x, wg, bg, w1, b1, w2, b2)
    assert jnp.allclose(out, ref_m, atol=5e-3, rtol=5e-3), "mismatch vs bf16-matched reference"
    assert jnp.allclose(out, ref_f, atol=5e-2, rtol=5e-2), "mismatch vs f32 reference"

    print("KERNEL_OK")
</pallas_src>

<mosaic_0001>
module attributes {stable_mosaic.version = 11 : i64} {
  func.func @swiglu_kernel(%arg0: i32, %arg1: i32, %arg2: memref<16x32xbf16, #tpu.memory_space<vmem>>, %arg3: memref<32x64xbf16, #tpu.memory_space<vmem>>, %arg4: memref<1x64xf32, #tpu.memory_space<vmem>>, %arg5: memref<32x64xbf16, #tpu.memory_space<vmem>>, %arg6: memref<1x64xf32, #tpu.memory_space<vmem>>, %arg7: memref<64x32xbf16, #tpu.memory_space<vmem>>, %arg8: memref<1x32xf32, #tpu.memory_space<vmem>>, %arg9: memref<16x32xf32, #tpu.memory_space<vmem>>, %arg10: memref<16x32xf32, #tpu.memory_space<vmem>>) attributes {dimension_semantics = [#tpu.dimension_semantics<parallel>, #tpu.dimension_semantics<arbitrary>], iteration_bounds = array<i64: 1, 1>, scalar_prefetch = 0 : i64, scratch_operands = 1 : i64, tpu.core_type = #tpu.core_type<tc>, window_params = [{transform_indices = @transform_0, window_bounds = array<i64: 16, 32>}, {transform_indices = @transform_1, window_bounds = array<i64: 32, 64>}, {transform_indices = @transform_2, window_bounds = array<i64: 1, 64>}, {transform_indices = @transform_3, window_bounds = array<i64: 32, 64>}, {transform_indices = @transform_4, window_bounds = array<i64: 1, 64>}, {transform_indices = @transform_5, window_bounds = array<i64: 64, 32>}, {pipeline_mode = #tpu.pipeline_mode<synchronous>, transform_indices = @transform_6, window_bounds = array<i64: 1, 32>}, {transform_indices = @transform_7, window_bounds = array<i64: 16, 32>}]} {
    %c0_i32 = arith.constant 0 : i32
    %0 = arith.cmpi eq, %arg1, %c0_i32 : i32
    %1 = arith.extui %0 : i1 to i32
    %c0_i32_0 = arith.constant 0 : i32
    %2 = arith.cmpi ne, %1, %c0_i32_0 : i32
    scf.if %2 {
      %cst_21 = arith.constant 0.000000e+00 : f32
      %30 = vector.broadcast %cst_21 : f32 to vector<16x32xf32>
      %c0_22 = arith.constant 0 : index
      %c0_23 = arith.constant 0 : index
      %31 = vector.load %arg10[%c0_22, %c0_23] : memref<16x32xf32, #tpu.memory_space<vmem>>, vector<16x32xf32>
      tpu.vector_store %arg10[%c0_22, %c0_23], %30 {strides = array<i32>} : memref<16x32xf32, #tpu.memory_space<vmem>>, vector<16x32xf32>,
    } else {
    }
    %c0 = arith.constant 0 : index
    %c0_1 = arith.constant 0 : index
    %3 = vector.load %arg2[%c0, %c0_1] : memref<16x32xbf16, #tpu.memory_space<vmem>>, vector<16x32xbf16>
    %c0_2 = arith.constant 0 : index
    %c0_3 = arith.constant 0 : index
    %4 = vector.load %arg3[%c0_2, %c0_3] : memref<32x64xbf16, #tpu.memory_space<vmem>>, vector<32x64xbf16>
    %cst = arith.constant dense<0.000000e+00> : vector<16x64xf32>
    %5 = tpu.matmul %3, %4, %cst {dimension_numbers = #tpu.dot_dimension_numbers<[1], [0], [0], [1], [0, 0, 1, 1], [], []>} : vector<16x32xbf16>, vector<32x64xbf16>, vector<16x64xf32> -> vector<16x64xf32>
    %c0_4 = arith.constant 0 : index
    %c0_5 = arith.constant 0 : index
    %6 = vector.load %arg4[%c0_4, %c0_5] : memref<1x64xf32, #tpu.memory_space<vmem>>, vector<1x64xf32>
    %7 = vector.broadcast %6 : vector<1x64xf32> to vector<16x64xf32>
    %8 = arith.addf %5, %7 : vector<16x64xf32>
    %9 = arith.negf %8 : vector<16x64xf32>
    %10 = math.exp %9 : vector<16x64xf32>
    %cst_6 = arith.constant 1.000000e+00 : f32
    %11 = vector.broadcast %cst_6 : f32 to vector<16x64xf32>
    %12 = arith.addf %11, %10 : vector<16x64xf32>
    %13 = arith.divf %11, %12 : vector<16x64xf32>
    %14 = arith.mulf %8, %13 : vector<16x64xf32>
    %c0_7 = arith.constant 0 : index
    %c0_8 = arith.constant 0 : index
    %15 = vector.load %arg5[%c0_7, %c0_8] : memref<32x64xbf16, #tpu.memory_space<vmem>>, vector<32x64xbf16>
    %cst_9 = arith.constant dense<0.000000e+00> : vector<16x64xf32>
    %16 = tpu.matmul %3, %15, %cst_9 {dimension_numbers = #tpu.dot_dimension_numbers<[1], [0], [0], [1], [0, 0, 1, 1], [], []>} : vector<16x32xbf16>, vector<32x64xbf16>, vector<16x64xf32> -> vector<16x64xf32>
    %c0_10 = arith.constant 0 : index
    %c0_11 = arith.constant 0 : index
    %17 = vector.load %arg6[%c0_10, %c0_11] : memref<1x64xf32, #tpu.memory_space<vmem>>, vector<1x64xf32>
    %18 = vector.broadcast %17 : vector<1x64xf32> to vector<16x64xf32>
    %19 = arith.addf %16, %18 : vector<16x64xf32>
    %20 = arith.mulf %14, %19 : vector<16x64xf32>
    %21 = arith.truncf %20 : vector<16x64xf32> to vector<16x64xbf16>
    %c0_12 = arith.constant 0 : index
    %c0_13 = arith.constant 0 : index
    %22 = vector.load %arg10[%c0_12, %c0_13] : memref<16x32xf32, #tpu.memory_space<vmem>>, vector<16x32xf32>
    %c0_14 = arith.constant 0 : index
    %c0_15 = arith.constant 0 : index
    %23 = vector.load %arg7[%c0_14, %c0_15] : memref<64x32xbf16, #tpu.memory_space<vmem>>, vector<64x32xbf16>
    %cst_16 = arith.constant dense<0.000000e+00> : vector<16x32xf32>
    %24 = tpu.matmul %21, %23, %cst_16 {dimension_numbers = #tpu.dot_dimension_numbers<[1], [0], [0], [1], [0, 0, 1, 1], [], []>} : vector<16x64xbf16>, vector<64x32xbf16>, vector<16x32xf32> -> vector<16x32xf32>
    %25 = arith.addf %22, %24 : vector<16x32xf32>
    %c0_17 = arith.constant 0 : index
    %c0_18 = arith.constant 0 : index
    %26 = vector.load %arg10[%c0_17, %c0_18] : memref<16x32xf32, #tpu.memory_space<vmem>>, vector<16x32xf32>
    tpu.vector_store %arg10[%c0_17, %c0_18], %25 {strides = array<i32>} : memref<16x32xf32, #tpu.memory_space<vmem>>, vector<16x32xf32>,
    %c0_i32_19 = arith.constant 0 : i32
    %27 = arith.cmpi eq, %arg1, %c0_i32_19 : i32
    %28 = arith.extui %27 : i1 to i32
    %c0_i32_20 = arith.constant 0 : i32
    %29 = arith.cmpi ne, %28, %c0_i32_20 : i32
    scf.if %29 {
      %c0_21 = arith.constant 0 : index
      %c0_22 = arith.constant 0 : index
      %30 = vector.load %arg10[%c0_21, %c0_22] : memref<16x32xf32, #tpu.memory_space<vmem>>, vector<16x32xf32>
      %c0_23 = arith.constant 0 : index
      %c0_24 = arith.constant 0 : index
      %31 = vector.load %arg8[%c0_23, %c0_24] : memref<1x32xf32, #tpu.memory_space<vmem>>, vector<1x32xf32>
      %32 = vector.broadcast %31 : vector<1x32xf32> to vector<16x32xf32>
      %33 = arith.addf %30, %32 : vector<16x32xf32>
      %c0_25 = arith.constant 0 : index
      %c0_26 = arith.constant 0 : index
      %34 = vector.load %arg9[%c0_25, %c0_26] : memref<16x32xf32, #tpu.memory_space<vmem>>, vector<16x32xf32>
      tpu.vector_store %arg9[%c0_25, %c0_26], %33 {strides = array<i32>} : memref<16x32xf32, #tpu.memory_space<vmem>>, vector<16x32xf32>,
    } else {
    }
    return
  }
  func.func @transform_0(%arg0: i32, %arg1: i32) -> (i32, i32) {
    %c0_i32 = arith.constant 0 : i32
    %c0_i32_0 = arith.constant 0 : i32
    return %arg0, %c0_i32 : i32, i32
  }
  func.func @transform_1(%arg0: i32, %arg1: i32) -> (i32, i32) {
    %c0_i32 = arith.constant 0 : i32
    %c0_i32_0 = arith.constant 0 : i32
    return %c0_i32, %arg1 : i32, i32
  }
  func.func @transform_2(%arg0: i32, %arg1: i32) -> (i32, i32) {
    %c0_i32 = arith.constant 0 : i32
    %c0_i32_0 = arith.constant 0 : i32
    return %c0_i32, %arg1 : i32, i32
  }
  func.func @transform_3(%arg0: i32, %arg1: i32) -> (i32, i32) {
    %c0_i32 = arith.constant 0 : i32
    %c0_i32_0 = arith.constant 0 : i32
    return %c0_i32, %arg1 : i32, i32
  }
  func.func @transform_4(%arg0: i32, %arg1: i32) -> (i32, i32) {
    %c0_i32 = arith.constant 0 : i32
    %c0_i32_0 = arith.constant 0 : i32
    return %c0_i32, %arg1 : i32, i32
  }
  func.func @transform_5(%arg0: i32, %arg1: i32) -> (i32, i32) {
    %c0_i32 = arith.constant 0 : i32
    %c0_i32_0 = arith.constant 0 : i32
    return %arg1, %c0_i32 : i32, i32
  }
  func.func @transform_6(%arg0: i32, %arg1: i32) -> (i32, i32) {
    %c0_i32 = arith.constant 0 : i32
    %c0_i32_0 = arith.constant 0 : i32
    %c0_i32_1 = arith.constant 0 : i32
    return %c0_i32, %c0_i32_0 : i32, i32
  }
  func.func @transform_7(%arg0: i32, %arg1: i32) -> (i32, i32) {
    %c0_i32 = arith.constant 0 : i32
    %c0_i32_0 = arith.constant 0 : i32
    return %arg0, %c0_i32 : i32, i32
  }
}

</mosaic_0001>

<llo_original>
// kernel: tpu_custom_call.1
$region0: #{tpu_custom_call.1}
  #allocation0 [shape = 'u32[]', space=smem, size = 0x4, offset = 0x4, fixed_abs, tag = 'smem constant byte address 0x4 - core index']
  #allocation1 [shape = 'u32[72,128]{1,0:T(1,128)}', space=vmem, size = 0x9000, scoped, tag = 'internal scratch']
  #allocation2 [shape = 'f32[16,32]{1,0:T(8,128)}', space=vmem, size = 0x2000, scoped, tag = 'scratch operand']
  %s0 = inlined_call_operand.vmem [shape: bf16[16,32], index: 0, kind: input, shape index: {}]
  %s1 = inlined_call_operand.vmem [shape: bf16[32,64], index: 1, kind: input, shape index: {}]
  %s2 = inlined_call_operand.vmem [shape: f32[1,64], index: 2, kind: input, shape index: {}]
  %s3 = inlined_call_operand.vmem [shape: bf16[32,64], index: 3, kind: input, shape index: {}]
  %s4 = inlined_call_operand.vmem [shape: f32[1,64], index: 4, kind: input, shape index: {}]
  %s5 = inlined_call_operand.vmem [shape: bf16[64,32], index: 5, kind: input, shape index: {}]
  %s6 = inlined_call_operand.vmem [shape: f32[1,32], index: 6, kind: input, shape index: {}]
  %s7 = inlined_call_operand.hbm [shape: f32[16,32], index: 7, kind: output, shape index: {}]
  %s8 = sld [smem:[#allocation0]]
  $region46: #{tpu_custom_call.1} parent=0
    _
  %s10 = ssub.s32 1, %s8
  %s11 = scalar_select 0, %s10, %s8
  $region1: #{tpu_custom_call.1} parent=0
    #allocation3 [shape = 'u8[8192]{0}', space=vmem, size = 0x2000, scoped, tag = 'output window, operand 0, single buffered']
    #allocation4 [shape = 's32[1]{0}', space=sflag, size = 0x4, scoped, tag = 'scoped memory for tpu_custom_call.1']
    %12 = vsyncpa [#allocation4], 0
    // Predicated region
    $region2: #{tpu_custom_call.1} parent=1 // pred_check
      _
    $region3: #{tpu_custom_call.1} parent=1 // pred_check_branch
      %14 = sbr.rel (0) target = $region5
    $region4: #{tpu_custom_call.1} parent=1 // pred_region
      _
    $region5: #{tpu_custom_call.1} parent=1 // pred_fallthru
      _
    // Predicated region
    $region6: #{tpu_custom_call.1} parent=1 // pred_check
      _
    $region7: #{tpu_custom_call.1} parent=1 // pred_check_branch
      %16 = sbr.rel (0) target = $region9
    $region8: #{tpu_custom_call.1} parent=1 // pred_region
      _
    $region9: #{tpu_custom_call.1} parent=1 // pred_fallthru
      _
    // Predicated region
    $region10: #{tpu_custom_call.1} parent=1 // pred_check
      _
    $region11: #{tpu_custom_call.1} parent=1 // pred_check_branch
      %18 = sbr.rel (0) target = $region13
    $region12: #{tpu_custom_call.1} parent=1 // pred_region
      _
    $region13: #{tpu_custom_call.1} parent=1 // pred_fallthru
      _
    // Predicated region
    $region14: #{tpu_custom_call.1} parent=1 // pred_check
      _
    $region15: #{tpu_custom_call.1} parent=1 // pred_check_branch
      %20 = sbr.rel (0) target = $region17
    $region16: #{tpu_custom_call.1} parent=1 // pred_region
      _
    $region17: #{tpu_custom_call.1} parent=1 // pred_fallthru
      _
    // Predicated region
    $region18: #{tpu_custom_call.1} parent=1 // pred_check
      _
    $region19: #{tpu_custom_call.1} parent=1 // pred_check_branch
      %22 = sbr.rel (0) target = $region21
    $region20: #{tpu_custom_call.1} parent=1 // pred_region
      _
    $region21: #{tpu_custom_call.1} parent=1 // pred_fallthru
      _
    // Predicated region
    $region22: #{tpu_custom_call.1} parent=1 // pred_check
      _
    $region23: #{tpu_custom_call.1} parent=1 // pred_check_branch
      %24 = sbr.rel (0) target = $region25
    $region24: #{tpu_custom_call.1} parent=1 // pred_region
      _
    $region25: #{tpu_custom_call.1} parent=1 // pred_fallthru
      _
    // Predicated region
    $region26: #{tpu_custom_call.1} parent=1 // pred_check
      _
    $region27: #{tpu_custom_call.1} parent=1 // pred_check_branch
      %26 = sbr.rel (0) target = $region29
    $region28: #{tpu_custom_call.1} parent=1 // pred_region
      _
    $region29: #{tpu_custom_call.1} parent=1 // pred_fallthru
      _
    %p28 = scmp.eq.s32.totalorder 0, 0
    // Predicated region
    $region30: #{tpu_custom_call.1} parent=1 // pred_check
      %p29 = pneg %p28
    $region31: #{tpu_custom_call.1} parent=1 // pred_check_branch
      %31 = sbr.rel (%p29) target = $region33
    $region32: #{tpu_custom_call.1} parent=1 // pred_region
      %vm32 = vcmask 261120
      %33 = vst.msk [vmem:[#allocation2] sm:$0xff] %vm32, 0.0
      %34 = vst.msk [vmem:[#allocation2 + $0x8] sm:$0xff] %vm32, 0.0
    $region33: #{tpu_custom_call.1} parent=1 // pred_fallthru
      _
    %v35 = vld [vmem:[%s0] sm:$0xf]
    %v36 = vld [vmem:[%s0 + $0x4] sm:$0xf]
    %v37 = vld [vmem:[%s1] sm:$0xf]
    %v38 = vld [vmem:[%s1 + $0x4] sm:$0xf]
    %v39 = vld [vmem:[%s1 + $0x8] sm:$0xf]
    %v40 = vld [vmem:[%s1 + $0xc] sm:$0xf]
    %v41 = vld [vmem:[%s2] sm:$0x1]
    %v43 = vperm.slane %v41, 0
    %v47 = vunpack.c.l.b16 %v35
    %v48 = vunpack.c.l.b16 %v36
    %v49 = vpack.c.b16 %v48, %v47
    %v54 = vunpack.c.l.b16 %v37
    %v55 = vunpack.c.l.b16 %v38
    %v56 = vunpack.c.l.b16 %v39
    %v57 = vunpack.c.l.b16 %v40
    %v58 = vpack.c.b16 %v55, %v54
    %v59 = vpack.c.b16 %v57, %v56
    %vm62 = vcmask 261120
    %v64 = vsel %vm62, %v49, 0
    %66 = vmatpush.bf16.msra.mxu0 0
    %67 = vmatpush.bf16.msra.mxu0 0
    %68 = vmatpush.bf16.msra.mxu0 0
    %69 = vmatpush.bf16.msra.mxu0 0
    %70 = vmatpush.bf16.msra.mxu0 0
    %71 = vmatpush.bf16.msra.mxu0 0
    %72 = vmatpush.bf16.msra.mxu0 %v59
    %73 = vmatpush.bf16.msra.mxu0 %v58
    %74 = vmatmul.bf16.gmra.mxu0 %v64
    %v75 = vpop.f32.mrf.mxu0
    %v76 = vadd.f32 %v43, %v75
    %v77 = vpop.f32.mrf.mxu0
    %v78 = vadd.f32 %v43, %v77
    %79 = vdwg.mxu0
    %v80 = vxor.u32 %v76, 2147483648
    %v81 = vxor.u32 %v78, 2147483648
    %v82 = vmul.f32 %v80, 1.442695
    %v83 = vpow.pop %v82
    %v84 = vmul.f32 %v81, 1.442695
    %v85 = vpow.pop %v84
    %v86 = vadd.f32 %v83, 1.0
    %v87 = vadd.f32 %v85, 1.0
    %v88 = vrcp.pop %v86
    %v89 = vmul.f32 %v86, %v88
    %v90 = vsub.f32 1.0, %v89
    %v91 = vmul.f32 %v88, %v90
    %v92 = vadd.f32 %v88, %v91
    %vm93 = vweird.f32 %v86
    %vm94 = vweird.f32 %v88
    %vm95 = vmor %vm93, %vm94
    %v96 = vsel %vm95, %v88, %v92
    %v97 = vand.u32 2147483647, %v86
    %vm98 = vcmp.eq.f32.partialorder %v97, 8.507059e+37
    %v99 = vand.u32 %v86, 2147483648
    %v100 = vor.u32 1.1754944e-38, %v99
    %v101 = vsel %vm98, %v100, %v96
    %v102 = vmul.f32 1.0, %v101
    %v103 = vrcp.pop %v87
    %v104 = vmul.f32 %v87, %v103
    %v105 = vsub.f32 1.0, %v104
    %v106 = vmul.f32 %v103, %v105
    %v107 = vadd.f32 %v103, %v106
    %vm108 = vweird.f32 %v87
    %vm109 = vweird.f32 %v103
    %vm110 = vmor %vm108, %vm109
    %v111 = vsel %vm110, %v103, %v107
    %v112 = vand.u32 2147483647, %v87
    %vm113 = vcmp.eq.f32.partialorder %v112, 8.507059e+37
    %v114 = vand.u32 %v87, 2147483648
    %v115 = vor.u32 1.1754944e-38, %v114
    %v116 = vsel %vm113, %v115, %v111
    %v117 = vmul.f32 1.0, %v116
    %v118 = vmul.f32 %v76, %v102
    %v119 = vmul.f32 %v78, %v117
    %v120 = vld [vmem:[%s3] sm:$0xf]
    %v121 = vld [vmem:[%s3 + $0x4] sm:$0xf]
    %v122 = vld [vmem:[%s3 + $0x8] sm:$0xf]
    %v123 = vld [vmem:[%s3 + $0xc] sm:$0xf]
    %v124 = vld [vmem:[%s4] sm:$0x1]
    %v126 = vperm.slane %v124, 0
    %v132 = vunpack.c.l.b16 %v120
    %v133 = vunpack.c.l.b16 %v121
    %v134 = vunpack.c.l.b16 %v122
    %v135 = vunpack.c.l.b16 %v123
    %v136 = vpack.c.b16 %v133, %v132
    %v137 = vpack.c.b16 %v135, %v134
    %140 = vmatpush.bf16.msra.mxu0 0
    %141 = vmatpush.bf16.msra.mxu0 0
    %142 = vmatpush.bf16.msra.mxu0 0
    %143 = vmatpush.bf16.msra.mxu0 0
    %144 = vmatpush.bf16.msra.mxu0 0
    %145 = vmatpush.bf16.msra.mxu0 0
    %146 = vmatpush.bf16.msra.mxu0 %v137
    %147 = vmatpush.bf16.msra.mxu0 %v136
    %148 = vmatmul.bf16.gmra.mxu0 %v64
    %v149 = vpop.f32.mrf.mxu0
    %v150 = vadd.f32 %v126, %v149
    %v151 = vpop.f32.mrf.mxu0
    %v152 = vadd.f32 %v126, %v151
    %153 = vdwg.mxu0
    %v154 = vmul.f32 %v118, %v150
    %v155 = vmul.f32 %v119, %v152
    %v156 = vpack.c.bf16 %v155, %v154
    %v157 = vld [vmem:[#allocation2] sm:$0xff]
    %v158 = vld [vmem:[#allocation2 + $0x8] sm:$0xff]
    %v159 = vld [vmem:[%s5] sm:$0xf]
    %v160 = vld [vmem:[%s5 + $0x4] sm:$0xf]
    %v161 = vld [vmem:[%s5 + $0x8] sm:$0xf]
    %v162 = vld [vmem:[%s5 + $0xc] sm:$0xf]
    %v163 = vld [vmem:[%s5 + $0x10] sm:$0xf]
    %v164 = vld [vmem:[%s5 + $0x14] sm:$0xf]
    %v165 = vld [vmem:[%s5 + $0x18] sm:$0xf]
    %v166 = vld [vmem:[%s5 + $0x1c] sm:$0xf]
    %v175 = vunpack.c.l.b16 %v159
    %v176 = vunpack.c.l.b16 %v160
    %v177 = vunpack.c.l.b16 %v161
    %v178 = vunpack.c.l.b16 %v162
    %v179 = vunpack.c.l.b16 %v163
    %v180 = vunpack.c.l.b16 %v164
    %v181 = vunpack.c.l.b16 %v165
    %v182 = vunpack.c.l.b16 %v166
    %v183 = vpack.c.b16 %v176, %v175
    %v184 = vpack.c.b16 %v178, %v177
    %v185 = vpack.c.b16 %v180, %v179
    %v186 = vpack.c.b16 %v182, %v181
    %vm191 = vcmask 523264
    %v193 = vsel %vm191, %v156, 0
    %195 = vmatpush.bf16.msra.mxu0 0
    %196 = vmatpush.bf16.msra.mxu0 0
    %197 = vmatpush.bf16.msra.mxu0 0
    %198 = vmatpush.bf16.msra.mxu0 0
    %199 = vmatpush.bf16.msra.mxu0 %v186
    %200 = vmatpush.bf16.msra.mxu0 %v185
    %201 = vmatpush.bf16.msra.mxu0 %v184
    %202 = vmatpush.bf16.msra.mxu0 %v183
    %203 = vmatmul.bf16.gmra.mxu0 %v193
    %v204 = vpop.f32.mrf.mxu0
    %v205 = vadd.f32 0.0, %v204
    %v206 = vpop.f32.mrf.mxu0
    %v207 = vadd.f32 0.0, %v206
    %208 = vdwg.mxu0
    %v209 = vadd.f32 %v157, %v205
    %v210 = vadd.f32 %v158, %v207
    %211 = vst.msk [vmem:[#allocation2] sm:$0xff] %vm62, %v209
    %212 = vst.msk [vmem:[#allocation2 + $0x8] sm:$0xff] %vm62, %v210
    // Predicated region
    $region34: #{tpu_custom_call.1} parent=1 // pred_check
      %p213 = pneg %p28
    $region35: #{tpu_custom_call.1} parent=1 // pred_check_branch
      %215 = sbr.rel (%p213) target = $region37
    $region36: #{tpu_custom_call.1} parent=1 // pred_region
      %v216 = vld [vmem:[#allocation2] sm:$0xff]
      %v217 = vld [vmem:[#allocation2 + $0x8] sm:$0xff]
      %v218 = vld [vmem:[%s6] sm:$0x1]
      %v220 = vperm.slane %v218, 0
      %v222 = vadd.f32 %v216, %v220
      %v223 = vadd.f32 %v217, %v220
      %224 = vst.msk [vmem:[#allocation3] sm:$0xff] %vm62, %v222
      %225 = vst.msk [vmem:[#allocation3 + $0x8] sm:$0xff] %vm62, %v223
    $region37: #{tpu_custom_call.1} parent=1 // pred_fallthru
      _
    // Predicated region
    $region38: #{tpu_custom_call.1} parent=1 // pred_check
      _
    $region39: #{tpu_custom_call.1} parent=1 // pred_check_branch
      %227 = sbr.rel (0) target = $region41
    $region40: #{tpu_custom_call.1} parent=1 // pred_region
      %229 = vsyncadd [#allocation4], 0
      %s230 = sshll.u32 [#allocation3], 4
      %s231 = int_to_ptr.vmem [resolvable:$true] %s230
      %s232 = sshll.u32 %s7, 4
      %s233 = int_to_ptr.hbm [resolvable:$true] %s232
      %238 = dma.vmem_to_hbm [thread:$0]  %s231, 256, %s233, [#allocation4], 128, 128, 8
    $region41: #{tpu_custom_call.1} parent=1 // pred_fallthru
      _
    // Predicated region
    $region42: #{tpu_custom_call.1} parent=1 // pred_check
      _
    $region43: #{tpu_custom_call.1} parent=1 // pred_check_branch
      %240 = sbr.rel (0) target = $region45
    $region44: #{tpu_custom_call.1} parent=1 // pred_region
      %242 = dma.done [#allocation4], 256
    $region45: #{tpu_custom_call.1} parent=1 // pred_fallthru
      _
    %243 = vsyncpa [#allocation4], 1

</llo_original>
